<compile_context>
chip_gen: v7x
topology: tpu7x:2x2x1
jax: 0.10.0
libtpu: 0.0.40
codegen_flags: <defaults>
</compile_context>

<pallas_src>
import functools

import jax
import jax.numpy as jnp
from jax.experimental import pallas as pl
from jax.experimental.pallas import tpu as pltpu


def _round_up(v, m):
    return (v + m - 1) // m * m


def _rmsnorm_linear_kernel(x_ref, nw_ref, w_ref, *rest, eps, has_bias):
    # x_ref:(tm, D)  nw_ref:(1, D)  w_ref:(tn, D)  [b_ref:(1, tn)]  o_ref:(tm, tn)
    # y_scr:(tm, D) scratch holding the normalized (and weight-dtype-cast) rows.
    if has_bias:
        b_ref, o_ref, y_scr = rest
    else:
        b_ref = None
        o_ref, y_scr = rest

    j = pl.program_id(1)
    inv_d = 1.0 / x_ref.shape[-1]  # static constant, hoisted

    @pl.when(j == 0)
    def _():
        x = x_ref[...].astype(jnp.float32)
        var = jnp.sum(x * x, axis=-1, keepdims=True) * inv_d
        rstd = jax.lax.rsqrt(var + eps)              # EUP
        y = (x * rstd) * nw_ref[...].astype(jnp.float32)
        # Cast to the linear-weight dtype before the matmul (matches F.linear path).
        y_scr[...] = y.astype(y_scr.dtype)

    # (tm, D) x (tn, D) contracting on D -> (tm, tn); MXU handles the transposed
    # RHS orientation directly, so no weight transpose is ever materialized.
    acc = jax.lax.dot_general(
        y_scr[...], w_ref[...],
        dimension_numbers=(((1,), (1,)), ((), ())),
        preferred_element_type=jnp.float32)
    if has_bias:
        acc = acc + b_ref[...].astype(jnp.float32)
    o_ref[...] = acc.astype(o_ref.dtype)


def rmsnorm_linear(x, norm_weight, linear_weight, linear_bias=None, *,
                   eps=1e-5, tm=256, tn=512):
    """Fused RMSNorm + Linear forward.

    x:             (..., D)
    norm_weight:   (D,)
    linear_weight: (N, D)   (PyTorch nn.Linear convention, passed un-transposed)
    linear_bias:   (N,) or None
    returns:       (..., N), dtype = x.dtype
    """
    orig_shape = x.shape
    D = orig_shape[-1]
    N, D_w = linear_weight.shape
    assert D_w == D, "linear_weight must be (N, D)"

    x2d = x.reshape(-1, D)
    T = x2d.shape[0]
    out_dtype = x.dtype

    # --- row tile: big by default, clamped for small T, padded for ragged T ---
    itemsize = jnp.dtype(x.dtype).itemsize
    sub = 8 if itemsize >= 4 else (16 if itemsize == 2 else 32)  # sublane packing
    tm = max(sub, min(_round_up(tm, sub), _round_up(T, sub)))
    T_pad = _round_up(T, tm)
    if T_pad != T:
        x2d = jnp.pad(x2d, ((0, T_pad - T), (0, 0)))

    # --- N tile: multiple of 128 that divides N (or the full N) ---
    if N % 128 == 0:
        tn = min(_round_up(tn, 128), N)
        while N % tn != 0:
            tn -= 128
    else:
        tn = N

    nw = norm_weight.reshape(1, D)
    has_bias = linear_bias is not None

    grid = (T_pad // tm, N // tn)

    in_specs = [
        pl.BlockSpec((tm, D), lambda i, j: (i, 0)),   # x rows (not re-fetched over j)
        pl.BlockSpec((1, D), lambda i, j: (0, 0)),    # norm weight (broadcast)
        pl.BlockSpec((tn, D), lambda i, j: (j, 0)),   # linear weight (N,D), N-tiled
    ]
    inputs = [x2d, nw, linear_weight]
    if has_bias:
        in_specs.append(pl.BlockSpec((1, tn), lambda i, j: (0, j)))
        inputs.append(linear_bias.reshape(1, N))

    # --- VMEM budget (double-buffered I/O + scratch) -> scoped limit hint ---
    wb = jnp.dtype(linear_weight.dtype).itemsize
    ob = jnp.dtype(out_dtype).itemsize
    needed = 2 * (tm * D * itemsize + D * 4 + tn * D * wb + tm * tn * ob)
    if has_bias:
        needed += 2 * tn * jnp.dtype(linear_bias.dtype).itemsize
    needed += tm * D * wb                              # normalized-row scratch
    vmem_limit = min(max(needed + (8 << 20), 32 << 20), 128 << 20)

    kernel = functools.partial(_rmsnorm_linear_kernel, eps=eps, has_bias=has_bias)

    out = pl.pallas_call(
        kernel,
        out_shape=jax.ShapeDtypeStruct((T_pad, N), out_dtype),
        grid_spec=pltpu.PrefetchScalarGridSpec(
            num_scalar_prefetch=0,
            grid=grid,
            in_specs=in_specs,
            out_specs=pl.BlockSpec((tm, tn), lambda i, j: (i, j)),
            scratch_shapes=[pltpu.VMEM((tm, D), linear_weight.dtype)],
        ),
        compiler_params=pltpu.CompilerParams(
            # j must stay sequential (scratch filled at j==0); i shards over TCs.
            dimension_semantics=("parallel", "arbitrary"),
            vmem_limit_bytes=vmem_limit,
        ),
    )(*inputs)

    if T_pad != T:
        out = out[:T]
    return out.reshape(*orig_shape[:-1], N)


# TODO(synk): residual / prenorm / num_groups>1 paths and the backward pass are
# not implemented; this covers the default RMSNormLinear forward.


def _reference(x, norm_weight, linear_weight, linear_bias, eps):
    x32 = x.astype(jnp.float32)
    var = jnp.mean(x32 * x32, axis=-1, keepdims=True)
    y = x32 * jax.lax.rsqrt(var + eps) * norm_weight.astype(jnp.float32)
    out = y.astype(linear_weight.dtype) @ linear_weight.T
    if linear_bias is not None:
        out = out + linear_bias
    return out.astype(x.dtype)


if __name__ == "__main__":
    key = jax.random.PRNGKey(0)
    eps = 1e-5

    # --- case 1: with bias, T divides the (clamped) tile ---
    batch, seq, hidden, out_features = 2, 8, 128, 256
    k1, k2, k3, k4 = jax.random.split(key, 4)
    x = jax.random.normal(k1, (batch, seq, hidden), dtype=jnp.float32)
    norm_weight = jnp.ones((hidden,), dtype=jnp.float32)  # RMSNormLinear init: ones
    linear_weight = jax.random.normal(k2, (out_features, hidden), dtype=jnp.float32) * 0.02
    linear_bias = jax.random.normal(k3, (out_features,), dtype=jnp.float32) * 0.1

    out = rmsnorm_linear(x, norm_weight, linear_weight, linear_bias, eps=eps)
    out = jax.block_until_ready(out)
    ref = _reference(x, norm_weight, linear_weight, linear_bias, eps)
    assert out.shape == (batch, seq, out_features)
    assert jnp.allclose(out, ref, atol=1e-4, rtol=1e-4), "mismatch vs reference (bias)"

    # --- case 2: no bias, ragged T (exercises padding + bias-less kernel) ---
    x2 = jax.random.normal(k4, (2, 10, hidden), dtype=jnp.float32)
    out2 = rmsnorm_linear(x2, norm_weight, linear_weight, None, eps=eps)
    out2 = jax.block_until_ready(out2)
    ref2 = _reference(x2, norm_weight, linear_weight, None, eps)
    assert out2.shape == (2, 10, out_features)
    assert jnp.allclose(out2, ref2, atol=1e-4, rtol=1e-4), "mismatch vs reference (no bias)"

    print("KERNEL_OK")
</pallas_src>

<mosaic_0001>
module attributes {stable_mosaic.version = 11 : i64} {
  func.func @_rmsnorm_linear_kernel(%arg0: i32, %arg1: i32, %arg2: memref<16x128xf32, #tpu.memory_space<vmem>>, %arg3: memref<1x128xf32, #tpu.memory_space<vmem>>, %arg4: memref<256x128xf32, #tpu.memory_space<vmem>>, %arg5: memref<1x256xf32, #tpu.memory_space<vmem>>, %arg6: memref<16x256xf32, #tpu.memory_space<vmem>>, %arg7: memref<16x128xf32, #tpu.memory_space<vmem>>) attributes {dimension_semantics = [#tpu.dimension_semantics<parallel>, #tpu.dimension_semantics<arbitrary>], iteration_bounds = array<i64: 1, 1>, scalar_prefetch = 0 : i64, scratch_operands = 1 : i64, tpu.core_type = #tpu.core_type<tc>, window_params = [{transform_indices = @transform_0, window_bounds = array<i64: 16, 128>}, {pipeline_mode = #tpu.pipeline_mode<synchronous>, transform_indices = @transform_1, window_bounds = array<i64: 1, 128>}, {transform_indices = @transform_2, window_bounds = array<i64: 256, 128>}, {transform_indices = @transform_3, window_bounds = array<i64: 1, 256>}, {transform_indices = @transform_4, window_bounds = array<i64: 16, 256>}]} {
    %c0_i32 = arith.constant 0 : i32
    %0 = arith.cmpi eq, %arg1, %c0_i32 : i32
    %1 = arith.extui %0 : i1 to i32
    %c0_i32_0 = arith.constant 0 : i32
    %2 = arith.cmpi ne, %1, %c0_i32_0 : i32
    scf.if %2 {
      %c0_8 = arith.constant 0 : index
      %c0_9 = arith.constant 0 : index
      %10 = vector.load %arg2[%c0_8, %c0_9] : memref<16x128xf32, #tpu.memory_space<vmem>>, vector<16x128xf32>
      %11 = arith.mulf %10, %10 : vector<16x128xf32>
      %cst_10 = arith.constant dense<0.000000e+00> : vector<16xf32>
      %12 = vector.multi_reduction <add>, %11, %cst_10 [1] : vector<16x128xf32> to vector<16xf32>
      %13 = vector.shape_cast %12 : vector<16xf32> to vector<16x1xf32>
      %cst_11 = arith.constant 7.812500e-03 : f32
      %14 = vector.broadcast %cst_11 : f32 to vector<16x1xf32>
      %15 = arith.mulf %13, %14 : vector<16x1xf32>
      %cst_12 = arith.constant 9.99999974E-6 : f32
      %16 = vector.broadcast %cst_12 : f32 to vector<16x1xf32>
      %17 = arith.addf %15, %16 : vector<16x1xf32>
      %18 = math.rsqrt %17 : vector<16x1xf32>
      %19 = vector.broadcast %18 : vector<16x1xf32> to vector<16x128xf32>
      %20 = arith.mulf %10, %19 : vector<16x128xf32>
      %c0_13 = arith.constant 0 : index
      %c0_14 = arith.constant 0 : index
      %21 = vector.load %arg3[%c0_13, %c0_14] : memref<1x128xf32, #tpu.memory_space<vmem>>, vector<1x128xf32>
      %22 = vector.broadcast %21 : vector<1x128xf32> to vector<16x128xf32>
      %23 = arith.mulf %20, %22 : vector<16x128xf32>
      %c0_15 = arith.constant 0 : index
      %c0_16 = arith.constant 0 : index
      %24 = vector.load %arg7[%c0_15, %c0_16] : memref<16x128xf32, #tpu.memory_space<vmem>>, vector<16x128xf32>
      tpu.vector_store %arg7[%c0_15, %c0_16], %23 {strides = array<i32>} : memref<16x128xf32, #tpu.memory_space<vmem>>, vector<16x128xf32>,
    } else {
    }
    %c0 = arith.constant 0 : index
    %c0_1 = arith.constant 0 : index
    %3 = vector.load %arg7[%c0, %c0_1] : memref<16x128xf32, #tpu.memory_space<vmem>>, vector<16x128xf32>
    %c0_2 = arith.constant 0 : index
    %c0_3 = arith.constant 0 : index
    %4 = vector.load %arg4[%c0_2, %c0_3] : memref<256x128xf32, #tpu.memory_space<vmem>>, vector<256x128xf32>
    %cst = arith.constant dense<0.000000e+00> : vector<16x256xf32>
    %5 = tpu.matmul %3, %4, %cst {dimension_numbers = #tpu.dot_dimension_numbers<[1], [1], [0], [0], [0, 0, 1, 0], [], []>} : vector<16x128xf32>, vector<256x128xf32>, vector<16x256xf32> -> vector<16x256xf32>
    %c0_4 = arith.constant 0 : index
    %c0_5 = arith.constant 0 : index
    %6 = vector.load %arg5[%c0_4, %c0_5] : memref<1x256xf32, #tpu.memory_space<vmem>>, vector<1x256xf32>
    %7 = vector.broadcast %6 : vector<1x256xf32> to vector<16x256xf32>
    %8 = arith.addf %5, %7 : vector<16x256xf32>
    %c0_6 = arith.constant 0 : index
    %c0_7 = arith.constant 0 : index
    %9 = vector.load %arg6[%c0_6, %c0_7] : memref<16x256xf32, #tpu.memory_space<vmem>>, vector<16x256xf32>
    tpu.vector_store %arg6[%c0_6, %c0_7], %8 {strides = array<i32>} : memref<16x256xf32, #tpu.memory_space<vmem>>, vector<16x256xf32>,
    return
  }
  func.func @transform_0(%arg0: i32, %arg1: i32) -> (i32, i32) {
    %c0_i32 = arith.constant 0 : i32
    %c0_i32_0 = arith.constant 0 : i32
    return %arg0, %c0_i32 : i32, i32
  }
  func.func @transform_1(%arg0: i32, %arg1: i32) -> (i32, i32) {
    %c0_i32 = arith.constant 0 : i32
    %c0_i32_0 = arith.constant 0 : i32
    %c0_i32_1 = arith.constant 0 : i32
    return %c0_i32, %c0_i32_0 : i32, i32
  }
  func.func @transform_2(%arg0: i32, %arg1: i32) -> (i32, i32) {
    %c0_i32 = arith.constant 0 : i32
    %c0_i32_0 = arith.constant 0 : i32
    return %arg1, %c0_i32 : i32, i32
  }
  func.func @transform_3(%arg0: i32, %arg1: i32) -> (i32, i32) {
    %c0_i32 = arith.constant 0 : i32
    %c0_i32_0 = arith.constant 0 : i32
    return %c0_i32, %arg1 : i32, i32
  }
  func.func @transform_4(%arg0: i32, %arg1: i32) -> (i32, i32) {
    %c0_i32 = arith.constant 0 : i32
    return %arg0, %arg1 : i32, i32
  }
}

</mosaic_0001>

<llo_original>
// kernel: tpu_custom_call.1
$region0: #{tpu_custom_call.1}
  #allocation0 [shape = 'u32[]', space=smem, size = 0x4, offset = 0x4, fixed_abs, tag = 'smem constant byte address 0x4 - core index']
  #allocation1 [shape = 'u32[144,128]{1,0:T(1,128)}', space=vmem, size = 0x12000, scoped, tag = 'internal scratch']
  #allocation2 [shape = 'f32[16,128]{1,0:T(8,128)}', space=vmem, size = 0x2000, scoped, tag = 'scratch operand']
  %s0 = inlined_call_operand.hbm [shape: f32[16,128], index: 0, kind: input, shape index: {}]
  %s1 = inlined_call_operand.vmem [shape: f32[1,128], index: 1, kind: input, shape index: {}]
  %s2 = inlined_call_operand.hbm [shape: f32[256,128], index: 2, kind: input, shape index: {}]
  %s3 = inlined_call_operand.vmem [shape: f32[1,256], index: 3, kind: input, shape index: {}]
  %s4 = inlined_call_operand.hbm [shape: f32[16,256], index: 4, kind: output, shape index: {}]
  %s5 = sld [smem:[#allocation0]]
  $region38: #{tpu_custom_call.1} parent=0
    _
  %s7 = ssub.s32 1, %s5
  %s8 = scalar_select 0, %s7, %s5
  $region1: #{tpu_custom_call.1} parent=0
    #allocation3 [shape = 'u8[8192]{0}', space=vmem, size = 0x2000, scoped, tag = 'input window, operand 0, single buffered']
    #allocation4 [shape = 's32[1]{0}', space=sflag, size = 0x4, scoped, tag = 'scoped memory for tpu_custom_call.1']
    #allocation5 [shape = 's32[1]{0}', space=sflag, size = 0x4, scoped, tag = 'scoped memory for tpu_custom_call.1']
    #allocation6 [shape = 'u8[131072]{0}', space=vmem, size = 0x20000, scoped, tag = 'input window, operand 2, single buffered']
    #allocation7 [shape = 's32[1]{0}', space=sflag, size = 0x4, scoped, tag = 'scoped memory for tpu_custom_call.1']
    #allocation8 [shape = 'u8[16384]{0}', space=vmem, size = 0x4000, scoped, tag = 'output window, operand 0, single buffered']
    %9 = vsyncpa [#allocation4], 0
    %10 = vsyncpa [#allocation7], 0
    %11 = vsyncpa [#allocation5], 0
    // Predicated region
    $region2: #{tpu_custom_call.1} parent=1 // pred_check
      _
    $region3: #{tpu_custom_call.1} parent=1 // pred_check_branch
      %13 = sbr.rel (0) target = $region5
    $region4: #{tpu_custom_call.1} parent=1 // pred_region
      %s15 = ssub.s32 256, 256
      %16 = vsyncadd [#allocation4], %s15
      %s17 = sshll.u32 [#allocation3], 4
      %s18 = int_to_ptr.vmem [resolvable:$true] %s17
      %23 = dma.hbm_to_vmem [thread:$0]  %s0, 256, %s18, [#allocation4], 128, 128, 8
    $region5: #{tpu_custom_call.1} parent=1 // pred_fallthru
      _
    // Predicated region
    $region6: #{tpu_custom_call.1} parent=1 // pred_check
      _
    $region7: #{tpu_custom_call.1} parent=1 // pred_check_branch
      %25 = sbr.rel (0) target = $region9
    $region8: #{tpu_custom_call.1} parent=1 // pred_region
      _
    $region9: #{tpu_custom_call.1} parent=1 // pred_fallthru
      _
    // Predicated region
    $region10: #{tpu_custom_call.1} parent=1 // pred_check
      _
    $region11: #{tpu_custom_call.1} parent=1 // pred_check_branch
      %27 = sbr.rel (0) target = $region13
    $region12: #{tpu_custom_call.1} parent=1 // pred_region
      %s29 = ssub.s32 4096, 4096
      %30 = vsyncadd [#allocation7], %s29
      %s31 = sshll.u32 [#allocation6], 4
      %s32 = int_to_ptr.vmem [resolvable:$true] %s31
      %37 = dma.hbm_to_vmem [thread:$0]  %s2, 4096, %s32, [#allocation7], 128, 128, 8
    $region13: #{tpu_custom_call.1} parent=1 // pred_fallthru
      _
    // Predicated region
    $region14: #{tpu_custom_call.1} parent=1 // pred_check
      _
    $region15: #{tpu_custom_call.1} parent=1 // pred_check_branch
      %39 = sbr.rel (0) target = $region17
    $region16: #{tpu_custom_call.1} parent=1 // pred_region
      _
    $region17: #{tpu_custom_call.1} parent=1 // pred_fallthru
      _
    // Predicated region
    $region18: #{tpu_custom_call.1} parent=1 // pred_check
      _
    $region19: #{tpu_custom_call.1} parent=1 // pred_check_branch
      %41 = sbr.rel (0) target = $region21
    $region20: #{tpu_custom_call.1} parent=1 // pred_region
      %42 = dma.done [#allocation4], 256
    $region21: #{tpu_custom_call.1} parent=1 // pred_fallthru
      _
    // Predicated region
    $region22: #{tpu_custom_call.1} parent=1 // pred_check
      _
    $region23: #{tpu_custom_call.1} parent=1 // pred_check_branch
      %44 = sbr.rel (0) target = $region25
    $region24: #{tpu_custom_call.1} parent=1 // pred_region
      %45 = dma.done [#allocation7], 4096
    $region25: #{tpu_custom_call.1} parent=1 // pred_fallthru
      _
    %p46 = scmp.eq.s32.totalorder 0, 0
    // Predicated region
    $region26: #{tpu_custom_call.1} parent=1 // pred_check
      %p47 = pneg %p46
    $region27: #{tpu_custom_call.1} parent=1 // pred_check_branch
      %49 = sbr.rel (%p47) target = $region29
    $region28: #{tpu_custom_call.1} parent=1 // pred_region
      %v50 = vld [vmem:[#allocation3] sm:$0xff]
      %v51 = vld [vmem:[#allocation3 + $0x8] sm:$0xff]
      %v52 = vmul.f32 %v50, %v50
      %v53 = vmul.f32 %v51, %v51
      %54 = vadd.xlane.f32.xlu0 %v52
      %v55 = vpop.xlane.xlu0 %54
      %56 = vadd.xlane.f32.xlu0 %v53
      %v57 = vpop.xlane.xlu0 %56
      %v58 = vmul.f32 %v55, 0.0078125
      %v59 = vmul.f32 %v57, 0.0078125
      %v60 = vadd.f32 %v58, 1e-05
      %v61 = vadd.f32 %v59, 1e-05
      %v62 = vrsqrt.pop %v60
      %v63 = vrsqrt.pop %v61
      %v64 = vmul.f32 %v50, %v62
      %v65 = vmul.f32 %v51, %v63
      %v66 = vld [vmem:[%s1] sm:$0x1]
      %v68 = vlaneseq
      %v69 = vshrl.u32 %v68, 7
      %v70 = vsub.s32 0, %v69
      %v71 = vrot.slane %v66, %v70
      %v73 = vmul.f32 %v64, %v71
      %v74 = vmul.f32 %v65, %v71
      %75 = vst [vmem:[#allocation2] sm:$0xff] %v73
      %76 = vst [vmem:[#allocation2 + $0x8] sm:$0xff] %v74
    $region29: #{tpu_custom_call.1} parent=1 // pred_fallthru
      _
    %v77 = vld [vmem:[#allocation2] sm:$0xff]
    %v78 = vld [vmem:[#allocation2 + $0x8] sm:$0xff]
    %v79 = vld [vmem:[#allocation6] sm:$0xff]
    %v80 = vld [vmem:[#allocation6 + $0x8] sm:$0xff]
    %v81 = vld [vmem:[#allocation6 + $0x10] sm:$0xff]
    %v82 = vld [vmem:[#allocation6 + $0x18] sm:$0xff]
    %v83 = vld [vmem:[#allocation6 + $0x20] sm:$0xff]
    %v84 = vld [vmem:[#allocation6 + $0x28] sm:$0xff]
    %v85 = vld [vmem:[#allocation6 + $0x30] sm:$0xff]
    %v86 = vld [vmem:[#allocation6 + $0x38] sm:$0xff]
    %v87 = vld [vmem:[#allocation6 + $0x40] sm:$0xff]
    %v88 = vld [vmem:[#allocation6 + $0x48] sm:$0xff]
    %v89 = vld [vmem:[#allocation6 + $0x50] sm:$0xff]
    %v90 = vld [vmem:[#allocation6 + $0x58] sm:$0xff]
    %v91 = vld [vmem:[#allocation6 + $0x60] sm:$0xff]
    %v92 = vld [vmem:[#allocation6 + $0x68] sm:$0xff]
    %v93 = vld [vmem:[#allocation6 + $0x70] sm:$0xff]
    %v94 = vld [vmem:[#allocation6 + $0x78] sm:$0xff]
    %v95 = vld [vmem:[#allocation6 + $0x80] sm:$0xff]
    %v96 = vld [vmem:[#allocation6 + $0x88] sm:$0xff]
    %v97 = vld [vmem:[#allocation6 + $0x90] sm:$0xff]
    %v98 = vld [vmem:[#allocation6 + $0x98] sm:$0xff]
    %v99 = vld [vmem:[#allocation6 + $0xa0] sm:$0xff]
    %v100 = vld [vmem:[#allocation6 + $0xa8] sm:$0xff]
    %v101 = vld [vmem:[#allocation6 + $0xb0] sm:$0xff]
    %v102 = vld [vmem:[#allocation6 + $0xb8] sm:$0xff]
    %v103 = vld [vmem:[#allocation6 + $0xc0] sm:$0xff]
    %v104 = vld [vmem:[#allocation6 + $0xc8] sm:$0xff]
    %v105 = vld [vmem:[#allocation6 + $0xd0] sm:$0xff]
    %v106 = vld [vmem:[#allocation6 + $0xd8] sm:$0xff]
    %v107 = vld [vmem:[#allocation6 + $0xe0] sm:$0xff]
    %v108 = vld [vmem:[#allocation6 + $0xe8] sm:$0xff]
    %v109 = vld [vmem:[#allocation6 + $0xf0] sm:$0xff]
    %v110 = vld [vmem:[#allocation6 + $0xf8] sm:$0xff]
    %v111 = vld [vmem:[%s3] sm:$0x3]
    %v113 = vlaneseq
    %v114 = vshrl.u32 %v113, 7
    %v115 = vsub.s32 0, %v114
    %v116 = vrot.slane %v111, %v115
    %v117 = vlaneseq
    %v118 = vshrl.u32 %v117, 7
    %v119 = vsub.s32 1, %v118
    %v120 = vrot.slane %v111, %v119
    %123 = vmatprep.subr.mxu0 0.0
    %124 = vmatpush1.xpose.msra.mxu0 %v79
    %125 = vmatprep.subr.mxu0 0.0
    %126 = vmatpush1.xpose.msra.mxu0 %v80
    %127 = vmatprep.subr.mxu0 0.0
    %128 = vmatpush1.xpose.msra.mxu0 %v81
    %129 = vmatprep.subr.mxu0 0.0
    %130 = vmatpush1.xpose.msra.mxu0 %v82
    %131 = vmatprep.subr.mxu0 0.0
    %132 = vmatpush1.xpose.msra.mxu0 %v83
    %133 = vmatprep.subr.mxu0 0.0
    %134 = vmatpush1.xpose.msra.mxu0 %v84
    %135 = vmatprep.subr.mxu0 0.0
    %136 = vmatpush1.xpose.msra.mxu0 %v85
    %137 = vmatprep.subr.mxu0 0.0
    %138 = vmatpush1.xpose.msra.mxu0 %v86
    %139 = vmatprep.subr.mxu0 0.0
    %140 = vmatpush1.xpose.msra.mxu0 %v87
    %141 = vmatprep.subr.mxu0 0.0
    %142 = vmatpush1.xpose.msra.mxu0 %v88
    %143 = vmatprep.subr.mxu0 0.0
    %144 = vmatpush1.xpose.msra.mxu0 %v89
    %145 = vmatprep.subr.mxu0 0.0
    %146 = vmatpush1.xpose.msra.mxu0 %v90
    %147 = vmatprep.subr.mxu0 0.0
    %148 = vmatpush1.xpose.msra.mxu0 %v91
    %149 = vmatprep.subr.mxu0 0.0
    %150 = vmatpush1.xpose.msra.mxu0 %v92
    %151 = vmatprep.subr.mxu0 0.0
    %152 = vmatpush1.xpose.msra.mxu0 %v93
    %153 = vmatprep.subr.mxu0 0.0
    %154 = vmatpush1.xpose.msra.mxu0 %v94
    %155 = vmatprep.subr.mxu0 0.0
    %156 = vmatpush1.xpose.msra.mxu0 %v95
    %157 = vmatprep.subr.mxu0 0.0
    %158 = vmatpush1.xpose.msra.mxu0 %v96
    %159 = vmatprep.subr.mxu0 0.0
    %160 = vmatpush1.xpose.msra.mxu0 %v97
    %161 = vmatprep.subr.mxu0 0.0
    %162 = vmatpush1.xpose.msra.mxu0 %v98
    %163 = vmatprep.subr.mxu0 0.0
    %164 = vmatpush1.xpose.msra.mxu0 %v99
    %165 = vmatprep.subr.mxu0 0.0
    %166 = vmatpush1.xpose.msra.mxu0 %v100
    %167 = vmatprep.subr.mxu0 0.0
    %168 = vmatpush1.xpose.msra.mxu0 %v101
    %169 = vmatprep.subr.mxu0 0.0
    %170 = vmatpush1.xpose.msra.mxu0 %v102
    %171 = vmatprep.subr.mxu0 0.0
    %172 = vmatpush1.xpose.msra.mxu0 %v103
    %173 = vmatprep.subr.mxu0 0.0
    %174 = vmatpush1.xpose.msra.mxu0 %v104
    %175 = vmatprep.subr.mxu0 0.0
    %176 = vmatpush1.xpose.msra.mxu0 %v105
    %177 = vmatprep.subr.mxu0 0.0
    %178 = vmatpush1.xpose.msra.mxu0 %v106
    %179 = vmatprep.subr.mxu0 0.0
    %180 = vmatpush1.xpose.msra.mxu0 %v107
    %181 = vmatprep.subr.mxu0 0.0
    %182 = vmatpush1.xpose.msra.mxu0 %v108
    %183 = vmatprep.subr.mxu0 0.0
    %184 = vmatpush1.xpose.msra.mxu0 %v109
    %185 = vmatprep.subr.mxu0 0.0
    %186 = vmatpush1.xpose.msra.mxu0 %v110
    %187 = vmatprep.mubr.f32.mxu0 0.0
    %188 = vmatmul.mubr.f32.gmra.mrb[0].mxu0 %v77
    %v189 = vpop.f32.mrb[0].mxu0
    %v190 = vadd.f32 %v116, %v189
    %v191 = vpop.f32.mrb[0].mxu0
    %v192 = vadd.f32 %v120, %v191
    %193 = vmatprep.mubr.f32.mxu0 0.0
    %194 = vmatmul.mubr.f32.gmra.mrb[0].mxu0 %v78
    %v195 = vpop.f32.mrb[0].mxu0
    %v196 = vadd.f32 %v116, %v195
    %v197 = vpop.f32.mrb[0].mxu0
    %v198 = vadd.f32 %v120, %v197
    %199 = vdwg.mxu0
    %200 = vst [vmem:[#allocation8] sm:$0xff] %v190
    %201 = vst [vmem:[#allocation8 + $0x8] sm:$0xff] %v192
    %202 = vst [vmem:[#allocation8 + $0x10] sm:$0xff] %v196
    %203 = vst [vmem:[#allocation8 + $0x18] sm:$0xff] %v198
    // Predicated region
    $region30: #{tpu_custom_call.1} parent=1 // pred_check
      _
    $region31: #{tpu_custom_call.1} parent=1 // pred_check_branch
      %205 = sbr.rel (0) target = $region33
    $region32: #{tpu_custom_call.1} parent=1 // pred_region
      %s207 = ssub.s32 512, 512
      %208 = vsyncadd [#allocation5], %s207
      %s209 = sshll.u32 [#allocation8], 4
      %s210 = int_to_ptr.vmem [resolvable:$true] %s209
      %215 = dma.vmem_to_hbm [thread:$0]  %s210, 512, %s4, [#allocation5], 256, 256, 16
    $region33: #{tpu_custom_call.1} parent=1 // pred_fallthru
      _
    // Predicated region
    $region34: #{tpu_custom_call.1} parent=1 // pred_check
      _
    $region35: #{tpu_custom_call.1} parent=1 // pred_check_branch
      %217 = sbr.rel (0) target = $region37
    $region36: #{tpu_custom_call.1} parent=1 // pred_region
      %218 = dma.done [#allocation5], 512
    $region37: #{tpu_custom_call.1} parent=1 // pred_fallthru
      _
    %219 = vsyncpa [#allocation4], 1
    %220 = vsyncpa [#allocation7], 1
    %221 = vsyncpa [#allocation5], 1

</llo_original>
